<compile_context>
chip_gen: v6e
topology: v6e:2x2x1
jax: 0.10.0
libtpu: 0.0.40
codegen_flags: <defaults>
</compile_context>

<pallas_src>
import jax
import jax.numpy as jnp
from jax.experimental import pallas as pl
from jax.experimental.pallas import tpu as pltpu


def mlp_kernel(x_ref, w1_ref, b1_ref, w2_ref, b2_ref, o_ref):
    # Cast activations to the weight dtype in-kernel (no-op for f32 weights;
    # gives the bf16 MXU rate without a separate wrapper-side cast pass).
    x = x_ref[...].astype(w1_ref.dtype)
    # Hidden layer: MXU matmul with f32 accumulation, bias + ReLU on the VPU.
    h = jnp.dot(x, w1_ref[...], preferred_element_type=jnp.float32)
    h = jnp.maximum(h + b1_ref[...], 0.0)                       # (TB,H)+(1,H)
    # Output layer.
    out = jnp.dot(h.astype(w2_ref.dtype), w2_ref[...],
                  preferred_element_type=jnp.float32)
    o_ref[...] = (out + b2_ref[...]).astype(o_ref.dtype)


def _round_up(x, m):
    return (x + m - 1) // m * m


def _vmem_estimate(TB, K, H, A, x_bytes, w_bytes, weight_bufs):
    x_tile = 2 * TB * K * x_bytes                      # double-buffered x tile
    o_tile = 2 * TB * A * 4                            # double-buffered out tile
    weights = weight_bufs * (K * H * w_bytes + H * 4 + H * A * w_bytes + A * 4)
    hidden = TB * H * 4                                # (TB,H) f32 intermediate
    return x_tile + o_tile + weights + hidden


def mlp_forward(x, w1, b1, w2, b2, *, block_b=2048):
    """x: (B, num_input); w1:(K,H) b1:(1,H) w2:(H,A) b2:(1,A). Returns (B, A) f32.

    The weight dtype (f32 or bf16) selects the MXU input precision; biases,
    accumulation, ReLU and the output stay f32.
    """
    B, K = x.shape
    H = w1.shape[1]
    A = w2.shape[1]

    x_bytes = x.dtype.itemsize
    w_bytes = w1.dtype.itemsize

    # Batch tile: multiple of 8 sublanes, capped by block_b and by B itself.
    TB = min(_round_up(block_b, 8), _round_up(B, 8))
    # Shrink the tile if the (conservative, double-buffered-weight) VMEM
    # estimate would not fit comfortably even on v7x (64 MiB physical).
    vmem_budget = 48 << 20
    while TB > 8 and _vmem_estimate(TB, K, H, A, x_bytes, w_bytes, 2) > vmem_budget:
        TB = _round_up(TB // 2, 8)

    grid = (pl.cdiv(B, TB),)   # ragged last block handled by Pallas write-masking

    vmem_limit = int(min(
        64 << 20,  # stay within v7x physical VMEM
        (32 << 20) + 2 * _vmem_estimate(TB, K, H, A, x_bytes, w_bytes, 2)))

    cost = pl.CostEstimate(
        flops=2 * B * (K * H + H * A),
        transcendentals=0,
        bytes_accessed=(B * K * x_bytes + B * A * 4
                        + (K * H + H * A) * w_bytes + (H + A) * 4),
    )

    def build(single_buffer_weights):
        w_kwargs = (dict(pipeline_mode=pl.Buffered(1))
                    if single_buffer_weights else {})
        in_specs = [
            pl.BlockSpec((TB, K), lambda i: (i, 0)),              # x tile (pipelined)
            pl.BlockSpec((K, H), lambda i: (0, 0), **w_kwargs),   # W1 resident
            pl.BlockSpec((1, H), lambda i: (0, 0), **w_kwargs),   # b1 resident
            pl.BlockSpec((H, A), lambda i: (0, 0), **w_kwargs),   # W2 resident
            pl.BlockSpec((1, A), lambda i: (0, 0), **w_kwargs),   # b2 resident
        ]
        return pl.pallas_call(
            mlp_kernel,
            out_shape=jax.ShapeDtypeStruct((B, A), jnp.float32),
            grid_spec=pltpu.PrefetchScalarGridSpec(
                num_scalar_prefetch=0,
                grid=grid,
                in_specs=in_specs,
                out_specs=pl.BlockSpec((TB, A), lambda i: (i, 0)),
            ),
            compiler_params=pltpu.CompilerParams(
                dimension_semantics=("parallel",),   # megacore sharding on v7x
                vmem_limit_bytes=vmem_limit,
            ),
            cost_estimate=cost,
        )

    try:
        return jax.block_until_ready(build(True)(x, w1, b1, w2, b2))
    except Exception:
        # Some jax versions reject Buffered(1); fall back to the default
        # double-buffered weight blocks (identical numerics).
        return jax.block_until_ready(build(False)(x, w1, b1, w2, b2))


def init_params(key, num_input, num_hidden, num_actions):
    """Deterministic init mimicking torch.nn.Linear default (uniform +/- 1/sqrt(fan_in))."""
    k1, k2, k3, k4 = jax.random.split(key, 4)
    lim1 = 1.0 / (num_input ** 0.5)
    lim2 = 1.0 / (num_hidden ** 0.5)
    w1 = jax.random.uniform(k1, (num_input, num_hidden), jnp.float32, -lim1, lim1)
    b1 = jax.random.uniform(k2, (1, num_hidden), jnp.float32, -lim1, lim1)
    w2 = jax.random.uniform(k3, (num_hidden, num_actions), jnp.float32, -lim2, lim2)
    b2 = jax.random.uniform(k4, (1, num_actions), jnp.float32, -lim2, lim2)
    return w1, b1, w2, b2


if __name__ == "__main__":
    num_input, num_hidden, num_actions = 32, 64, 16

    key = jax.random.PRNGKey(0)
    kx, kp, kx2 = jax.random.split(key, 3)
    w1, b1, w2, b2 = init_params(kp, num_input, num_hidden, num_actions)

    def ref_fn(x):
        return jnp.maximum(x @ w1 + b1, 0.0) @ w2 + b2

    # Case 1: tiny batch, single grid step, whole problem VMEM-resident.
    batch = 8
    x = jax.random.normal(kx, (batch, num_input), jnp.float32)
    out = mlp_forward(x, w1, b1, w2, b2)
    jax.block_until_ready(out)
    assert out.shape == (batch, num_actions)
    assert jnp.allclose(out, ref_fn(x), atol=1e-5, rtol=1e-5)

    # Case 2: non-aligned batch exercising the ragged cdiv grid (3 steps,
    # last block has only 4 valid rows) with resident single-buffered weights
    # and the unpadded (masked-store) output path.
    batch2 = 260
    x2 = jax.random.normal(kx2, (batch2, num_input), jnp.float32)
    out2 = mlp_forward(x2, w1, b1, w2, b2, block_b=128)
    jax.block_until_ready(out2)
    assert out2.shape == (batch2, num_actions)
    assert jnp.allclose(out2, ref_fn(x2), atol=1e-5, rtol=1e-5)

    # Case 3: bf16 weight path (weights pre-cast once, as would happen at
    # param-init time); activations cast in-kernel, f32 accumulation.
    out3 = mlp_forward(x2, w1.astype(jnp.bfloat16), b1,
                       w2.astype(jnp.bfloat16), b2, block_b=128)
    jax.block_until_ready(out3)
    assert out3.shape == (batch2, num_actions)
    assert jnp.allclose(out3, ref_fn(x2), atol=6e-2, rtol=6e-2)

    print("KERNEL_OK")
</pallas_src>

<mosaic_0001>
module attributes {stable_mosaic.version = 11 : i64} {
  func.func @mlp_kernel(%arg0: i32, %arg1: memref<8x32xf32, #tpu.memory_space<vmem>>, %arg2: memref<32x64xf32, #tpu.memory_space<vmem>>, %arg3: memref<1x64xf32, #tpu.memory_space<vmem>>, %arg4: memref<64x16xf32, #tpu.memory_space<vmem>>, %arg5: memref<1x16xf32, #tpu.memory_space<vmem>>, %arg6: memref<8x16xf32, #tpu.memory_space<vmem>>) attributes {dimension_semantics = [#tpu.dimension_semantics<parallel>], iteration_bounds = array<i64: 1>, scalar_prefetch = 0 : i64, scratch_operands = 0 : i64, tpu.core_type = #tpu.core_type<tc>, window_params = [{transform_indices = @transform_0, window_bounds = array<i64: 8, 32>}, {pipeline_mode = #tpu.pipeline_mode<synchronous>, transform_indices = @transform_1, window_bounds = array<i64: 32, 64>}, {pipeline_mode = #tpu.pipeline_mode<synchronous>, transform_indices = @transform_2, window_bounds = array<i64: 1, 64>}, {pipeline_mode = #tpu.pipeline_mode<synchronous>, transform_indices = @transform_3, window_bounds = array<i64: 64, 16>}, {pipeline_mode = #tpu.pipeline_mode<synchronous>, transform_indices = @transform_4, window_bounds = array<i64: 1, 16>}, {transform_indices = @transform_5, window_bounds = array<i64: 8, 16>}]} {
    %c0 = arith.constant 0 : index
    %c0_0 = arith.constant 0 : index
    %0 = vector.load %arg1[%c0, %c0_0] : memref<8x32xf32, #tpu.memory_space<vmem>>, vector<8x32xf32>
    %c0_1 = arith.constant 0 : index
    %c0_2 = arith.constant 0 : index
    %1 = vector.load %arg2[%c0_1, %c0_2] : memref<32x64xf32, #tpu.memory_space<vmem>>, vector<32x64xf32>
    %cst = arith.constant dense<0.000000e+00> : vector<8x64xf32>
    %2 = tpu.matmul %0, %1, %cst {dimension_numbers = #tpu.dot_dimension_numbers<[1], [0], [0], [1], [0, 0, 1, 1], [], []>} : vector<8x32xf32>, vector<32x64xf32>, vector<8x64xf32> -> vector<8x64xf32>
    %c0_3 = arith.constant 0 : index
    %c0_4 = arith.constant 0 : index
    %3 = vector.load %arg3[%c0_3, %c0_4] : memref<1x64xf32, #tpu.memory_space<vmem>>, vector<1x64xf32>
    %4 = vector.broadcast %3 : vector<1x64xf32> to vector<8x64xf32>
    %5 = arith.addf %2, %4 : vector<8x64xf32>
    %cst_5 = arith.constant 0.000000e+00 : f32
    %6 = vector.broadcast %cst_5 : f32 to vector<8x64xf32>
    %7 = arith.maximumf %5, %6 : vector<8x64xf32>
    %c0_6 = arith.constant 0 : index
    %c0_7 = arith.constant 0 : index
    %8 = vector.load %arg4[%c0_6, %c0_7] : memref<64x16xf32, #tpu.memory_space<vmem>>, vector<64x16xf32>
    %cst_8 = arith.constant dense<0.000000e+00> : vector<8x16xf32>
    %9 = tpu.matmul %7, %8, %cst_8 {dimension_numbers = #tpu.dot_dimension_numbers<[1], [0], [0], [1], [0, 0, 1, 1], [], []>} : vector<8x64xf32>, vector<64x16xf32>, vector<8x16xf32> -> vector<8x16xf32>
    %c0_9 = arith.constant 0 : index
    %c0_10 = arith.constant 0 : index
    %10 = vector.load %arg5[%c0_9, %c0_10] : memref<1x16xf32, #tpu.memory_space<vmem>>, vector<1x16xf32>
    %11 = vector.broadcast %10 : vector<1x16xf32> to vector<8x16xf32>
    %12 = arith.addf %9, %11 : vector<8x16xf32>
    %c0_11 = arith.constant 0 : index
    %c0_12 = arith.constant 0 : index
    %13 = vector.load %arg6[%c0_11, %c0_12] : memref<8x16xf32, #tpu.memory_space<vmem>>, vector<8x16xf32>
    tpu.vector_store %arg6[%c0_11, %c0_12], %12 {strides = array<i32>} : memref<8x16xf32, #tpu.memory_space<vmem>>, vector<8x16xf32>,
    return
  }
  func.func @transform_0(%arg0: i32) -> (i32, i32) {
    %c0_i32 = arith.constant 0 : i32
    %c0_i32_0 = arith.constant 0 : i32
    return %arg0, %c0_i32 : i32, i32
  }
  func.func @transform_1(%arg0: i32) -> (i32, i32) {
    %c0_i32 = arith.constant 0 : i32
    %c0_i32_0 = arith.constant 0 : i32
    %c0_i32_1 = arith.constant 0 : i32
    return %c0_i32, %c0_i32_0 : i32, i32
  }
  func.func @transform_2(%arg0: i32) -> (i32, i32) {
    %c0_i32 = arith.constant 0 : i32
    %c0_i32_0 = arith.constant 0 : i32
    %c0_i32_1 = arith.constant 0 : i32
    return %c0_i32, %c0_i32_0 : i32, i32
  }
  func.func @transform_3(%arg0: i32) -> (i32, i32) {
    %c0_i32 = arith.constant 0 : i32
    %c0_i32_0 = arith.constant 0 : i32
    %c0_i32_1 = arith.constant 0 : i32
    return %c0_i32, %c0_i32_0 : i32, i32
  }
  func.func @transform_4(%arg0: i32) -> (i32, i32) {
    %c0_i32 = arith.constant 0 : i32
    %c0_i32_0 = arith.constant 0 : i32
    %c0_i32_1 = arith.constant 0 : i32
    return %c0_i32, %c0_i32_0 : i32, i32
  }
  func.func @transform_5(%arg0: i32) -> (i32, i32) {
    %c0_i32 = arith.constant 0 : i32
    %c0_i32_0 = arith.constant 0 : i32
    return %arg0, %c0_i32 : i32, i32
  }
}

module attributes {stable_mosaic.version = 11 : i64} {
  func.func @mlp_kernel(%arg0: i32, %arg1: memref<8x32xf32, #tpu.memory_space<vmem>>, %arg2: memref<32x64xf32, #tpu.memory_space<vmem>>, %arg3: memref<1x64xf32, #tpu.memory_space<vmem>>, %arg4: memref<64x16xf32, #tpu.memory_space<vmem>>, %arg5: memref<1x16xf32, #tpu.memory_space<vmem>>, %arg6: memref<8x16xf32, #tpu.memory_space<vmem>>) attributes {dimension_semantics = [#tpu.dimension_semantics<parallel>], iteration_bounds = array<i64: 1>, scalar_prefetch = 0 : i64, scratch_operands = 0 : i64, tpu.core_type = #tpu.core_type<tc>, window_params = [{transform_indices = @transform_0, window_bounds = array<i64: 8, 32>}, {pipeline_mode = #tpu.pipeline_mode<synchronous>, transform_indices = @transform_1, window_bounds = array<i64: 32, 64>}, {pipeline_mode = #tpu.pipeline_mode<synchronous>, transform_indices = @transform_2, window_bounds = array<i64: 1, 64>}, {pipeline_mode = #tpu.pipeline_mode<synchronous>, transform_indices = @transform_3, window_bounds = array<i64: 64, 16>}, {pipeline_mode = #tpu.pipeline_mode<synchronous>, transform_indices = @transform_4, window_bounds = array<i64: 1, 16>}, {transform_indices = @transform_5, window_bounds = array<i64: 8, 16>}]} {
    %c0 = arith.constant 0 : index
    %c0_0 = arith.constant 0 : index
    %0 = vector.load %arg1[%c0, %c0_0] : memref<8x32xf32, #tpu.memory_space<vmem>>, vector<8x32xf32>
    %c0_1 = arith.constant 0 : index
    %c0_2 = arith.constant 0 : index
    %1 = vector.load %arg2[%c0_1, %c0_2] : memref<32x64xf32, #tpu.memory_space<vmem>>, vector<32x64xf32>
    %cst = arith.constant dense<0.000000e+00> : vector<8x64xf32>
    %2 = tpu.matmul %0, %1, %cst {dimension_numbers = #tpu.dot_dimension_numbers<[1], [0], [0], [1], [0, 0, 1, 1], [], []>} : vector<8x32xf32>, vector<32x64xf32>, vector<8x64xf32> -> vector<8x64xf32>
    %c0_3 = arith.constant 0 : index
    %c0_4 = arith.constant 0 : index
    %3 = vector.load %arg3[%c0_3, %c0_4] : memref<1x64xf32, #tpu.memory_space<vmem>>, vector<1x64xf32>
    %4 = vector.broadcast %3 : vector<1x64xf32> to vector<8x64xf32>
    %5 = arith.addf %2, %4 : vector<8x64xf32>
    %cst_5 = arith.constant 0.000000e+00 : f32
    %6 = vector.broadcast %cst_5 : f32 to vector<8x64xf32>
    %7 = arith.maximumf %5, %6 : vector<8x64xf32>
    %c0_6 = arith.constant 0 : index
    %c0_7 = arith.constant 0 : index
    %8 = vector.load %arg4[%c0_6, %c0_7] : memref<64x16xf32, #tpu.memory_space<vmem>>, vector<64x16xf32>
    %cst_8 = arith.constant dense<0.000000e+00> : vector<8x16xf32>
    %9 = tpu.matmul %7, %8, %cst_8 {dimension_numbers = #tpu.dot_dimension_numbers<[1], [0], [0], [1], [0, 0, 1, 1], [], []>} : vector<8x64xf32>, vector<64x16xf32>, vector<8x16xf32> -> vector<8x16xf32>
    %c0_9 = arith.constant 0 : index
    %c0_10 = arith.constant 0 : index
    %10 = vector.load %arg5[%c0_9, %c0_10] : memref<1x16xf32, #tpu.memory_space<vmem>>, vector<1x16xf32>
    %11 = vector.broadcast %10 : vector<1x16xf32> to vector<8x16xf32>
    %12 = arith.addf %9, %11 : vector<8x16xf32>
    %c0_11 = arith.constant 0 : index
    %c0_12 = arith.constant 0 : index
    %13 = vector.load %arg6[%c0_11, %c0_12] : memref<8x16xf32, #tpu.memory_space<vmem>>, vector<8x16xf32>
    tpu.vector_store %arg6[%c0_11, %c0_12], %12 {strides = array<i32>} : memref<8x16xf32, #tpu.memory_space<vmem>>, vector<8x16xf32>,
    return
  }
  func.func @transform_0(%arg0: i32) -> (i32, i32) {
    %c0_i32 = arith.constant 0 : i32
    %c0_i32_0 = arith.constant 0 : i32
    return %arg0, %c0_i32 : i32, i32
  }
  func.func @transform_1(%arg0: i32) -> (i32, i32) {
    %c0_i32 = arith.constant 0 : i32
    %c0_i32_0 = arith.constant 0 : i32
    %c0_i32_1 = arith.constant 0 : i32
    return %c0_i32, %c0_i32_0 : i32, i32
  }
  func.func @transform_2(%arg0: i32) -> (i32, i32) {
    %c0_i32 = arith.constant 0 : i32
    %c0_i32_0 = arith.constant 0 : i32
    %c0_i32_1 = arith.constant 0 : i32
    return %c0_i32, %c0_i32_0 : i32, i32
  }
  func.func @transform_3(%arg0: i32) -> (i32, i32) {
    %c0_i32 = arith.constant 0 : i32
    %c0_i32_0 = arith.constant 0 : i32
    %c0_i32_1 = arith.constant 0 : i32
    return %c0_i32, %c0_i32_0 : i32, i32
  }
  func.func @transform_4(%arg0: i32) -> (i32, i32) {
    %c0_i32 = arith.constant 0 : i32
    %c0_i32_0 = arith.constant 0 : i32
    %c0_i32_1 = arith.constant 0 : i32
    return %c0_i32, %c0_i32_0 : i32, i32
  }
  func.func @transform_5(%arg0: i32) -> (i32, i32) {
    %c0_i32 = arith.constant 0 : i32
    %c0_i32_0 = arith.constant 0 : i32
    return %arg0, %c0_i32 : i32, i32
  }
}

</mosaic_0001>

<llo_original>
// kernel: tpu_custom_call.1
$region0: #{tpu_custom_call.1}
  #allocation0 [shape = 'u32[]', space=smem, size = 0x4, offset = 0x4, fixed_abs, tag = 'smem constant byte address 0x4 - core index']
  #allocation1 [shape = 'u32[144,128]{1,0:T(1,128)}', space=vmem, size = 0x12000, scoped, tag = 'internal scratch']
  %s0 = inlined_call_operand.vmem [shape: f32[8,32], index: 0, kind: input, shape index: {}]
  %s1 = inlined_call_operand.vmem [shape: f32[32,64], index: 1, kind: input, shape index: {}]
  %s2 = inlined_call_operand.vmem [shape: f32[1,64], index: 2, kind: input, shape index: {}]
  %s3 = inlined_call_operand.vmem [shape: f32[64,16], index: 3, kind: input, shape index: {}]
  %s4 = inlined_call_operand.vmem [shape: f32[1,16], index: 4, kind: input, shape index: {}]
  %s5 = inlined_call_operand.hbm [shape: f32[8,16], index: 5, kind: output, shape index: {}]
  %s6 = sld [smem:[#allocation0]]
  $region30: #{tpu_custom_call.1} parent=0
    _
  %s8 = ssub.s32 1, %s6
  %s9 = scalar_select 0, %s8, %s6
  $region1: #{tpu_custom_call.1} parent=0
    #allocation2 [shape = 'u8[4096]{0}', space=vmem, size = 0x1000, scoped, tag = 'output window, operand 0, single buffered']
    #allocation3 [shape = 's32[1]{0}', space=sflag, size = 0x4, scoped, tag = 'scoped memory for tpu_custom_call.1']
    %10 = vsyncpa [#allocation3], 0
    // Predicated region
    $region2: #{tpu_custom_call.1} parent=1 // pred_check
      _
    $region3: #{tpu_custom_call.1} parent=1 // pred_check_branch
      %12 = sbr.rel (0) target = $region5
    $region4: #{tpu_custom_call.1} parent=1 // pred_region
      _
    $region5: #{tpu_custom_call.1} parent=1 // pred_fallthru
      _
    // Predicated region
    $region6: #{tpu_custom_call.1} parent=1 // pred_check
      _
    $region7: #{tpu_custom_call.1} parent=1 // pred_check_branch
      %14 = sbr.rel (0) target = $region9
    $region8: #{tpu_custom_call.1} parent=1 // pred_region
      _
    $region9: #{tpu_custom_call.1} parent=1 // pred_fallthru
      _
    // Predicated region
    $region10: #{tpu_custom_call.1} parent=1 // pred_check
      _
    $region11: #{tpu_custom_call.1} parent=1 // pred_check_branch
      %16 = sbr.rel (0) target = $region13
    $region12: #{tpu_custom_call.1} parent=1 // pred_region
      _
    $region13: #{tpu_custom_call.1} parent=1 // pred_fallthru
      _
    // Predicated region
    $region14: #{tpu_custom_call.1} parent=1 // pred_check
      _
    $region15: #{tpu_custom_call.1} parent=1 // pred_check_branch
      %18 = sbr.rel (0) target = $region17
    $region16: #{tpu_custom_call.1} parent=1 // pred_region
      _
    $region17: #{tpu_custom_call.1} parent=1 // pred_fallthru
      _
    // Predicated region
    $region18: #{tpu_custom_call.1} parent=1 // pred_check
      _
    $region19: #{tpu_custom_call.1} parent=1 // pred_check_branch
      %20 = sbr.rel (0) target = $region21
    $region20: #{tpu_custom_call.1} parent=1 // pred_region
      _
    $region21: #{tpu_custom_call.1} parent=1 // pred_fallthru
      _
    %v21 = vld [vmem:[%s0] sm:$0xff]
    %v22 = vld [vmem:[%s1] sm:$0xff]
    %v23 = vld [vmem:[%s1 + $0x8] sm:$0xff]
    %v24 = vld [vmem:[%s1 + $0x10] sm:$0xff]
    %v25 = vld [vmem:[%s1 + $0x18] sm:$0xff]
    %v26 = vld [vmem:[%s2] sm:$0x1]
    %v28 = vlaneseq
    %v29 = vshrl.u32 %v28, 7
    %v30 = vsub.s32 0, %v29
    %v31 = vrot.slane %v26, %v30
    %vm33 = vcmask 261120
    %v35 = vsel %vm33, %v21, 0
    %37 = vmatprep.subr.mxu0 0.0
    %38 = vmatpush1.msra.mxu0 0.0
    %39 = vmatprep.subr.mxu0 0.0
    %40 = vmatpush1.msra.mxu0 0.0
    %41 = vmatprep.subr.mxu0 0.0
    %42 = vmatpush1.msra.mxu0 0.0
    %43 = vmatprep.subr.mxu0 0.0
    %44 = vmatpush1.msra.mxu0 0.0
    %45 = vmatprep.subr.mxu0 0.0
    %46 = vmatpush1.msra.mxu0 0.0
    %47 = vmatprep.subr.mxu0 0.0
    %48 = vmatpush1.msra.mxu0 0.0
    %49 = vmatprep.subr.mxu0 0.0
    %50 = vmatpush1.msra.mxu0 0.0
    %51 = vmatprep.subr.mxu0 0.0
    %52 = vmatpush1.msra.mxu0 0.0
    %53 = vmatprep.subr.mxu0 0.0
    %54 = vmatpush1.msra.mxu0 0.0
    %55 = vmatprep.subr.mxu0 0.0
    %56 = vmatpush1.msra.mxu0 0.0
    %57 = vmatprep.subr.mxu0 0.0
    %58 = vmatpush1.msra.mxu0 0.0
    %59 = vmatprep.subr.mxu0 0.0
    %60 = vmatpush1.msra.mxu0 0.0
    %61 = vmatprep.subr.mxu0 0.0
    %62 = vmatpush1.msra.mxu0 %v25
    %63 = vmatprep.subr.mxu0 0.0
    %64 = vmatpush1.msra.mxu0 %v24
    %65 = vmatprep.subr.mxu0 0.0
    %66 = vmatpush1.msra.mxu0 %v23
    %67 = vmatprep.subr.mxu0 0.0
    %68 = vmatpush1.msra.mxu0 %v22
    %69 = vmatprep.subr.mxu0 0.0
    %70 = vmatpush2.msra.mxu0 0.0
    %71 = vmatprep.subr.mxu0 0.0
    %72 = vmatpush2.msra.mxu0 0.0
    %73 = vmatprep.subr.mxu0 0.0
    %74 = vmatpush2.msra.mxu0 0.0
    %75 = vmatprep.subr.mxu0 0.0
    %76 = vmatpush2.msra.mxu0 0.0
    %77 = vmatprep.subr.mxu0 0.0
    %78 = vmatpush2.msra.mxu0 0.0
    %79 = vmatprep.subr.mxu0 0.0
    %80 = vmatpush2.msra.mxu0 0.0
    %81 = vmatprep.subr.mxu0 0.0
    %82 = vmatpush2.msra.mxu0 0.0
    %83 = vmatprep.subr.mxu0 0.0
    %84 = vmatpush2.msra.mxu0 0.0
    %85 = vmatprep.subr.mxu0 0.0
    %86 = vmatpush2.msra.mxu0 0.0
    %87 = vmatprep.subr.mxu0 0.0
    %88 = vmatpush2.msra.mxu0 0.0
    %89 = vmatprep.subr.mxu0 0.0
    %90 = vmatpush2.msra.mxu0 0.0
    %91 = vmatprep.subr.mxu0 0.0
    %92 = vmatpush2.msra.mxu0 0.0
    %93 = vmatprep.subr.mxu0 0.0
    %94 = vmatpush2.msra.mxu0 0.0
    %95 = vmatprep.subr.mxu0 0.0
    %96 = vmatpush2.msra.mxu0 0.0
    %97 = vmatprep.subr.mxu0 0.0
    %98 = vmatpush2.msra.mxu0 0.0
    %99 = vmatprep.subr.mxu0 0.0
    %100 = vmatpush2.msra.mxu0 0.0
    %101 = vmatprep.mubr.f32.mxu0 0.0
    %102 = vmatmul.mubr.f32.gmra.mxu0 %v35
    %v103 = vpop.f32.mrf.mxu0
    %v104 = vadd.f32 %v31, %v103
    %v105 = vpop.f32.mrf.mxu0
    %106 = vdwg.mxu0
    %v107 = vmax.f32 %v104, 0.0
    %v108 = vld [vmem:[%s3] sm:$0xff]
    %v109 = vld [vmem:[%s3 + $0x8] sm:$0xff]
    %v110 = vld [vmem:[%s3 + $0x10] sm:$0xff]
    %v111 = vld [vmem:[%s3 + $0x18] sm:$0xff]
    %v112 = vld [vmem:[%s3 + $0x20] sm:$0xff]
    %v113 = vld [vmem:[%s3 + $0x28] sm:$0xff]
    %v114 = vld [vmem:[%s3 + $0x30] sm:$0xff]
    %v115 = vld [vmem:[%s3 + $0x38] sm:$0xff]
    %v116 = vld [vmem:[%s4] sm:$0x1]
    %v118 = vlaneseq
    %v119 = vshrl.u32 %v118, 7
    %v120 = vsub.s32 0, %v119
    %v121 = vrot.slane %v116, %v120
    %vm123 = vcmask 523264
    %v125 = vsel %vm123, %v107, 0
    %127 = vmatprep.subr.mxu0 0.0
    %128 = vmatpush1.msra.mxu0 0.0
    %129 = vmatprep.subr.mxu0 0.0
    %130 = vmatpush1.msra.mxu0 0.0
    %131 = vmatprep.subr.mxu0 0.0
    %132 = vmatpush1.msra.mxu0 0.0
    %133 = vmatprep.subr.mxu0 0.0
    %134 = vmatpush1.msra.mxu0 0.0
    %135 = vmatprep.subr.mxu0 0.0
    %136 = vmatpush1.msra.mxu0 0.0
    %137 = vmatprep.subr.mxu0 0.0
    %138 = vmatpush1.msra.mxu0 0.0
    %139 = vmatprep.subr.mxu0 0.0
    %140 = vmatpush1.msra.mxu0 0.0
    %141 = vmatprep.subr.mxu0 0.0
    %142 = vmatpush1.msra.mxu0 0.0
    %143 = vmatprep.subr.mxu0 0.0
    %144 = vmatpush1.msra.mxu0 %v115
    %145 = vmatprep.subr.mxu0 0.0
    %146 = vmatpush1.msra.mxu0 %v114
    %147 = vmatprep.subr.mxu0 0.0
    %148 = vmatpush1.msra.mxu0 %v113
    %149 = vmatprep.subr.mxu0 0.0
    %150 = vmatpush1.msra.mxu0 %v112
    %151 = vmatprep.subr.mxu0 0.0
    %152 = vmatpush1.msra.mxu0 %v111
    %153 = vmatprep.subr.mxu0 0.0
    %154 = vmatpush1.msra.mxu0 %v110
    %155 = vmatprep.subr.mxu0 0.0
    %156 = vmatpush1.msra.mxu0 %v109
    %157 = vmatprep.subr.mxu0 0.0
    %158 = vmatpush1.msra.mxu0 %v108
    %159 = vmatprep.subr.mxu0 0.0
    %160 = vmatpush2.msra.mxu0 0.0
    %161 = vmatprep.subr.mxu0 0.0
    %162 = vmatpush2.msra.mxu0 0.0
    %163 = vmatprep.subr.mxu0 0.0
    %164 = vmatpush2.msra.mxu0 0.0
    %165 = vmatprep.subr.mxu0 0.0
    %166 = vmatpush2.msra.mxu0 0.0
    %167 = vmatprep.subr.mxu0 0.0
    %168 = vmatpush2.msra.mxu0 0.0
    %169 = vmatprep.subr.mxu0 0.0
    %170 = vmatpush2.msra.mxu0 0.0
    %171 = vmatprep.subr.mxu0 0.0
    %172 = vmatpush2.msra.mxu0 0.0
    %173 = vmatprep.subr.mxu0 0.0
    %174 = vmatpush2.msra.mxu0 0.0
    %175 = vmatprep.subr.mxu0 0.0
    %176 = vmatpush2.msra.mxu0 0.0
    %177 = vmatprep.subr.mxu0 0.0
    %178 = vmatpush2.msra.mxu0 0.0
    %179 = vmatprep.subr.mxu0 0.0
    %180 = vmatpush2.msra.mxu0 0.0
    %181 = vmatprep.subr.mxu0 0.0
    %182 = vmatpush2.msra.mxu0 0.0
    %183 = vmatprep.subr.mxu0 0.0
    %184 = vmatpush2.msra.mxu0 0.0
    %185 = vmatprep.subr.mxu0 0.0
    %186 = vmatpush2.msra.mxu0 0.0
    %187 = vmatprep.subr.mxu0 0.0
    %188 = vmatpush2.msra.mxu0 0.0
    %189 = vmatprep.subr.mxu0 0.0
    %190 = vmatpush2.msra.mxu0 0.0
    %191 = vmatprep.mubr.f32.mxu0 0.0
    %192 = vmatmul.mubr.f32.gmra.mxu0 %v125
    %v193 = vpop.f32.mrf.mxu0
    %v194 = vadd.f32 %v121, %v193
    %v195 = vpop.f32.mrf.mxu0
    %196 = vdwg.mxu0
    %vm197 = vcmask 130048
    %198 = vst.msk [vmem:[#allocation2] sm:$0xff] %vm197, %v194
    // Predicated region
    $region22: #{tpu_custom_call.1} parent=1 // pred_check
      _
    $region23: #{tpu_custom_call.1} parent=1 // pred_check_branch
      %200 = sbr.rel (0) target = $region25
    $region24: #{tpu_custom_call.1} parent=1 // pred_region
      %s202 = ssub.s32 128, 128
      %203 = vsyncadd [#allocation3], %s202
      %s205 = sshll.u32 [#allocation2], 4
      %s206 = int_to_ptr.vmem [resolvable:$true] %s205
      %208 = dma.vmem_to_hbm [thread:$0]  %s206, 128, %s5, [#allocation3]
    $region25: #{tpu_custom_call.1} parent=1 // pred_fallthru
      _
    // Predicated region
    $region26: #{tpu_custom_call.1} parent=1 // pred_check
      _
    $region27: #{tpu_custom_call.1} parent=1 // pred_check_branch
      %210 = sbr.rel (0) target = $region29
    $region28: #{tpu_custom_call.1} parent=1 // pred_region
      %211 = dma.done [#allocation3], 128
    $region29: #{tpu_custom_call.1} parent=1 // pred_fallthru
      _
    %212 = vsyncpa [#allocation3], 1

// kernel: tpu_custom_call.1
$region0: #{tpu_custom_call.1}
  #allocation0 [shape = 'u32[]', space=smem, size = 0x4, offset = 0x4, fixed_abs, tag = 'smem constant byte address 0x4 - core index']
  #allocation1 [shape = 'u32[144,128]{1,0:T(1,128)}', space=vmem, size = 0x12000, scoped, tag = 'internal scratch']
  %s0 = inlined_call_operand.vmem [shape: f32[8,32], index: 0, kind: input, shape index: {}]
  %s1 = inlined_call_operand.vmem [shape: f32[32,64], index: 1, kind: input, shape index: {}]
  %s2 = inlined_call_operand.vmem [shape: f32[1,64], index: 2, kind: input, shape index: {}]
  %s3 = inlined_call_operand.vmem [shape: f32[64,16], index: 3, kind: input, shape index: {}]
  %s4 = inlined_call_operand.vmem [shape: f32[1,16], index: 4, kind: input, shape index: {}]
  %s5 = inlined_call_operand.hbm [shape: f32[8,16], index: 5, kind: output, shape index: {}]
  %s6 = sld [smem:[#allocation0]]
  $region30: #{tpu_custom_call.1} parent=0
    _
  %s8 = ssub.s32 1, %s6
  %s9 = scalar_select 0, %s8, %s6
  $region1: #{tpu_custom_call.1} parent=0
    #allocation2 [shape = 'u8[4096]{0}', space=vmem, size = 0x1000, scoped, tag = 'output window, operand 0, single buffered']
    #allocation3 [shape = 's32[1]{0}', space=sflag, size = 0x4, scoped, tag = 'scoped memory for tpu_custom_call.1']
    %10 = vsyncpa [#allocation3], 0
    // Predicated region
    $region2: #{tpu_custom_call.1} parent=1 // pred_check
      _
    $region3: #{tpu_custom_call.1} parent=1 // pred_check_branch
      %12 = sbr.rel (0) target = $region5
    $region4: #{tpu_custom_call.1} parent=1 // pred_region
      _
    $region5: #{tpu_custom_call.1} parent=1 // pred_fallthru
      _
    // Predicated region
    $region6: #{tpu_custom_call.1} parent=1 // pred_check
      _
    $region7: #{tpu_custom_call.1} parent=1 // pred_check_branch
      %14 = sbr.rel (0) target = $region9
    $region8: #{tpu_custom_call.1} parent=1 // pred_region
      _
    $region9: #{tpu_custom_call.1} parent=1 // pred_fallthru
      _
    // Predicated region
    $region10: #{tpu_custom_call.1} parent=1 // pred_check
      _
    $region11: #{tpu_custom_call.1} parent=1 // pred_check_branch
      %16 = sbr.rel (0) target = $region13
    $region12: #{tpu_custom_call.1} parent=1 // pred_region
      _
    $region13: #{tpu_custom_call.1} parent=1 // pred_fallthru
      _
    // Predicated region
    $region14: #{tpu_custom_call.1} parent=1 // pred_check
      _
    $region15: #{tpu_custom_call.1} parent=1 // pred_check_branch
      %18 = sbr.rel (0) target = $region17
    $region16: #{tpu_custom_call.1} parent=1 // pred_region
      _
    $region17: #{tpu_custom_call.1} parent=1 // pred_fallthru
      _
    // Predicated region
    $region18: #{tpu_custom_call.1} parent=1 // pred_check
      _
    $region19: #{tpu_custom_call.1} parent=1 // pred_check_branch
      %20 = sbr.rel (0) target = $region21
    $region20: #{tpu_custom_call.1} parent=1 // pred_region
      _
    $region21: #{tpu_custom_call.1} parent=1 // pred_fallthru
      _
    %v21 = vld [vmem:[%s0] sm:$0xff]
    %v22 = vld [vmem:[%s1] sm:$0xff]
    %v23 = vld [vmem:[%s1 + $0x8] sm:$0xff]
    %v24 = vld [vmem:[%s1 + $0x10] sm:$0xff]
    %v25 = vld [vmem:[%s1 + $0x18] sm:$0xff]
    %v26 = vld [vmem:[%s2] sm:$0x1]
    %v28 = vlaneseq
    %v29 = vshrl.u32 %v28, 7
    %v30 = vsub.s32 0, %v29
    %v31 = vrot.slane %v26, %v30
    %vm33 = vcmask 261120
    %v35 = vsel %vm33, %v21, 0
    %37 = vmatprep.subr.mxu0 0.0
    %38 = vmatpush1.msra.mxu0 0.0
    %39 = vmatprep.subr.mxu0 0.0
    %40 = vmatpush1.msra.mxu0 0.0
    %41 = vmatprep.subr.mxu0 0.0
    %42 = vmatpush1.msra.mxu0 0.0
    %43 = vmatprep.subr.mxu0 0.0
    %44 = vmatpush1.msra.mxu0 0.0
    %45 = vmatprep.subr.mxu0 0.0
    %46 = vmatpush1.msra.mxu0 0.0
    %47 = vmatprep.subr.mxu0 0.0
    %48 = vmatpush1.msra.mxu0 0.0
    %49 = vmatprep.subr.mxu0 0.0
    %50 = vmatpush1.msra.mxu0 0.0
    %51 = vmatprep.subr.mxu0 0.0
    %52 = vmatpush1.msra.mxu0 0.0
    %53 = vmatprep.subr.mxu0 0.0
    %54 = vmatpush1.msra.mxu0 0.0
    %55 = vmatprep.subr.mxu0 0.0
    %56 = vmatpush1.msra.mxu0 0.0
    %57 = vmatprep.subr.mxu0 0.0
    %58 = vmatpush1.msra.mxu0 0.0
    %59 = vmatprep.subr.mxu0 0.0
    %60 = vmatpush1.msra.mxu0 0.0
    %61 = vmatprep.subr.mxu0 0.0
    %62 = vmatpush1.msra.mxu0 %v25
    %63 = vmatprep.subr.mxu0 0.0
    %64 = vmatpush1.msra.mxu0 %v24
    %65 = vmatprep.subr.mxu0 0.0
    %66 = vmatpush1.msra.mxu0 %v23
    %67 = vmatprep.subr.mxu0 0.0
    %68 = vmatpush1.msra.mxu0 %v22
    %69 = vmatprep.subr.mxu0 0.0
    %70 = vmatpush2.msra.mxu0 0.0
    %71 = vmatprep.subr.mxu0 0.0
    %72 = vmatpush2.msra.mxu0 0.0
    %73 = vmatprep.subr.mxu0 0.0
    %74 = vmatpush2.msra.mxu0 0.0
    %75 = vmatprep.subr.mxu0 0.0
    %76 = vmatpush2.msra.mxu0 0.0
    %77 = vmatprep.subr.mxu0 0.0
    %78 = vmatpush2.msra.mxu0 0.0
    %79 = vmatprep.subr.mxu0 0.0
    %80 = vmatpush2.msra.mxu0 0.0
    %81 = vmatprep.subr.mxu0 0.0
    %82 = vmatpush2.msra.mxu0 0.0
    %83 = vmatprep.subr.mxu0 0.0
    %84 = vmatpush2.msra.mxu0 0.0
    %85 = vmatprep.subr.mxu0 0.0
    %86 = vmatpush2.msra.mxu0 0.0
    %87 = vmatprep.subr.mxu0 0.0
    %88 = vmatpush2.msra.mxu0 0.0
    %89 = vmatprep.subr.mxu0 0.0
    %90 = vmatpush2.msra.mxu0 0.0
    %91 = vmatprep.subr.mxu0 0.0
    %92 = vmatpush2.msra.mxu0 0.0
    %93 = vmatprep.subr.mxu0 0.0
    %94 = vmatpush2.msra.mxu0 0.0
    %95 = vmatprep.subr.mxu0 0.0
    %96 = vmatpush2.msra.mxu0 0.0
    %97 = vmatprep.subr.mxu0 0.0
    %98 = vmatpush2.msra.mxu0 0.0
    %99 = vmatprep.subr.mxu0 0.0
    %100 = vmatpush2.msra.mxu0 0.0
    %101 = vmatprep.mubr.f32.mxu0 0.0
    %102 = vmatmul.mubr.f32.gmra.mxu0 %v35
    %v103 = vpop.f32.mrf.mxu0
    %v104 = vadd.f32 %v31, %v103
    %v105 = vpop.f32.mrf.mxu0
    %106 = vdwg.mxu0
    %v107 = vmax.f32 %v104, 0.0
    %v108 = vld [vmem:[%s3] sm:$0xff]
    %v109 = vld [vmem:[%s3 + $0x8] sm:$0xff]
    %v110 = vld [vmem:[%s3 + $0x10] sm:$0xff]
    %v111 = vld [vmem:[%s3 + $0x18] sm:$0xff]
    %v112 = vld [vmem:[%s3 + $0x20] sm:$0xff]
    %v113 = vld [vmem:[%s3 + $0x28] sm:$0xff]
    %v114 = vld [vmem:[%s3 + $0x30] sm:$0xff]
    %v115 = vld [vmem:[%s3 + $0x38] sm:$0xff]
    %v116 = vld [vmem:[%s4] sm:$0x1]
    %v118 = vlaneseq
    %v119 = vshrl.u32 %v118, 7
    %v120 = vsub.s32 0, %v119
    %v121 = vrot.slane %v116, %v120
    %vm123 = vcmask 523264
    %v125 = vsel %vm123, %v107, 0
    %127 = vmatprep.subr.mxu0 0.0
    %128 = vmatpush1.msra.mxu0 0.0
    %129 = vmatprep.subr.mxu0 0.0
    %130 = vmatpush1.msra.mxu0 0.0
    %131 = vmatprep.subr.mxu0 0.0
    %132 = vmatpush1.msra.mxu0 0.0
    %133 = vmatprep.subr.mxu0 0.0
    %134 = vmatpush1.msra.mxu0 0.0
    %135 = vmatprep.subr.mxu0 0.0
    %136 = vmatpush1.msra.mxu0 0.0
    %137 = vmatprep.subr.mxu0 0.0
    %138 = vmatpush1.msra.mxu0 0.0
    %139 = vmatprep.subr.mxu0 0.0
    %140 = vmatpush1.msra.mxu0 0.0
    %141 = vmatprep.subr.mxu0 0.0
    %142 = vmatpush1.msra.mxu0 0.0
    %143 = vmatprep.subr.mxu0 0.0
    %144 = vmatpush1.msra.mxu0 %v115
    %145 = vmatprep.subr.mxu0 0.0
    %146 = vmatpush1.msra.mxu0 %v114
    %147 = vmatprep.subr.mxu0 0.0
    %148 = vmatpush1.msra.mxu0 %v113
    %149 = vmatprep.subr.mxu0 0.0
    %150 = vmatpush1.msra.mxu0 %v112
    %151 = vmatprep.subr.mxu0 0.0
    %152 = vmatpush1.msra.mxu0 %v111
    %153 = vmatprep.subr.mxu0 0.0
    %154 = vmatpush1.msra.mxu0 %v110
    %155 = vmatprep.subr.mxu0 0.0
    %156 = vmatpush1.msra.mxu0 %v109
    %157 = vmatprep.subr.mxu0 0.0
    %158 = vmatpush1.msra.mxu0 %v108
    %159 = vmatprep.subr.mxu0 0.0
    %160 = vmatpush2.msra.mxu0 0.0
    %161 = vmatprep.subr.mxu0 0.0
    %162 = vmatpush2.msra.mxu0 0.0
    %163 = vmatprep.subr.mxu0 0.0
    %164 = vmatpush2.msra.mxu0 0.0
    %165 = vmatprep.subr.mxu0 0.0
    %166 = vmatpush2.msra.mxu0 0.0
    %167 = vmatprep.subr.mxu0 0.0
    %168 = vmatpush2.msra.mxu0 0.0
    %169 = vmatprep.subr.mxu0 0.0
    %170 = vmatpush2.msra.mxu0 0.0
    %171 = vmatprep.subr.mxu0 0.0
    %172 = vmatpush2.msra.mxu0 0.0
    %173 = vmatprep.subr.mxu0 0.0
    %174 = vmatpush2.msra.mxu0 0.0
    %175 = vmatprep.subr.mxu0 0.0
    %176 = vmatpush2.msra.mxu0 0.0
    %177 = vmatprep.subr.mxu0 0.0
    %178 = vmatpush2.msra.mxu0 0.0
    %179 = vmatprep.subr.mxu0 0.0
    %180 = vmatpush2.msra.mxu0 0.0
    %181 = vmatprep.subr.mxu0 0.0
    %182 = vmatpush2.msra.mxu0 0.0
    %183 = vmatprep.subr.mxu0 0.0
    %184 = vmatpush2.msra.mxu0 0.0
    %185 = vmatprep.subr.mxu0 0.0
    %186 = vmatpush2.msra.mxu0 0.0
    %187 = vmatprep.subr.mxu0 0.0
    %188 = vmatpush2.msra.mxu0 0.0
    %189 = vmatprep.subr.mxu0 0.0
    %190 = vmatpush2.msra.mxu0 0.0
    %191 = vmatprep.mubr.f32.mxu0 0.0
    %192 = vmatmul.mubr.f32.gmra.mxu0 %v125
    %v193 = vpop.f32.mrf.mxu0
    %v194 = vadd.f32 %v121, %v193
    %v195 = vpop.f32.mrf.mxu0
    %196 = vdwg.mxu0
    %vm197 = vcmask 130048
    %198 = vst.msk [vmem:[#allocation2] sm:$0xff] %vm197, %v194
    // Predicated region
    $region22: #{tpu_custom_call.1} parent=1 // pred_check
      _
    $region23: #{tpu_custom_call.1} parent=1 // pred_check_branch
      %200 = sbr.rel (0) target = $region25
    $region24: #{tpu_custom_call.1} parent=1 // pred_region
      %s202 = ssub.s32 128, 128
      %203 = vsyncadd [#allocation3], %s202
      %s205 = sshll.u32 [#allocation2], 4
      %s206 = int_to_ptr.vmem [resolvable:$true] %s205
      %208 = dma.vmem_to_hbm [thread:$0]  %s206, 128, %s5, [#allocation3]
    $region25: #{tpu_custom_call.1} parent=1 // pred_fallthru
      _
    // Predicated region
    $region26: #{tpu_custom_call.1} parent=1 // pred_check
      _
    $region27: #{tpu_custom_call.1} parent=1 // pred_check_branch
      %210 = sbr.rel (0) target = $region29
    $region28: #{tpu_custom_call.1} parent=1 // pred_region
      %211 = dma.done [#allocation3], 128
    $region29: #{tpu_custom_call.1} parent=1 // pred_fallthru
      _
    %212 = vsyncpa [#allocation3], 1

</llo_original>
